<compile_context>
chip_gen: v5e
topology: v5e:2x2
jax: 0.10.0
libtpu: 0.0.40
codegen_flags: <defaults>
</compile_context>

<pallas_src>
import functools

import jax
import jax.numpy as jnp
import numpy as np
from jax.experimental import pallas as pl
from jax.experimental.pallas import tpu as pltpu


# ---------------------------------------------------------------------------
# Kernels
# ---------------------------------------------------------------------------
def _stats_kernel(f_ref, s1_ref, s2_ref):
    """Accumulate per-(batch, channel) [sum(f), sum(f*f)] over HW tiles."""
    t = pl.program_id(2)

    @pl.when(t == 0)
    def _():
        s1_ref[...] = jnp.zeros_like(s1_ref)
        s2_ref[...] = jnp.zeros_like(s2_ref)

    f = f_ref[0].astype(jnp.float32)                        # (Cf, Ts)
    # Lane (spatial) reductions go to the XLU; the pass stays HBM-bound.
    s1_ref[0, 0] += jnp.sum(f, axis=-1, keepdims=True)      # (Cf, 1)
    s2_ref[0, 0] += jnp.sum(f * f, axis=-1, keepdims=True)  # (Cf, 1)


def _apply_kernel(f_ref, zq_ref, scale_ref, shift_ref, w_ref, b_ref, *rest,
                  cf, thz, wz, rh, rw):
    """Folded GroupNorm affine + fused 1x1 convs on native-res zq + in-kernel
    nearest expansion + combine, for one (batch, HW-tile) grid point."""
    o_ref = rest[-1]
    ew_ref = rest[0] if rw > 1 else None

    # Fused conv_y/conv_b at *native* zq resolution: (2Cf,Cz) @ (Cz,Tz) on MXU.
    zq = zq_ref[0]                                           # (Cz, Tz) native dtype
    yb = jnp.dot(w_ref[...], zq,
                 preferred_element_type=jnp.float32) + b_ref[...]   # (2Cf, Tz)

    if rh == 1 and rw == 1:
        yb_up = yb                                           # no upsample
    else:
        # Expand each native zq row to rh f-rows of W lanes:
        #   W direction: static one-hot matmul (Wz, W) on the MXU,
        #   H direction: lane-concat of rh copies (jnp.tile semantics).
        pieces = []
        for rz in range(thz):
            blk = yb[:, rz * wz:(rz + 1) * wz]               # (2Cf, Wz)
            if rw > 1:
                blk = jnp.dot(blk, ew_ref[...],
                              preferred_element_type=jnp.float32)   # (2Cf, W)
            pieces.extend([blk] * rh)
        yb_up = pieces[0] if len(pieces) == 1 else jnp.concatenate(pieces, axis=-1)

    y = yb_up[:cf]                                           # (Cf, T)
    b = yb_up[cf:]                                           # (Cf, T)

    # GroupNorm with affine folded into per-(batch,channel) scale/shift.
    norm = f_ref[0] * scale_ref[0] + shift_ref[0]            # (Cf, T), f32
    o_ref[0] = (norm * y + b).astype(o_ref.dtype)


# ---------------------------------------------------------------------------
# Tiling helpers
# ---------------------------------------------------------------------------
def _vmem_limit_bytes():
    cap = 64 * 1024 * 1024
    try:
        info = pltpu.get_tpu_info()
        cap = int(getattr(info, "vmem_capacity_bytes", cap)) or cap
    except Exception:
        pass
    # Headroom below physical VMEM (64 MiB on v7x, 128 MiB on v5e/v6e).
    return int(min(cap * 3 // 4, 96 * 1024 * 1024))


def _pick_lanes(total, target):
    """Largest multiple-of-128 divisor of `total` that is <= target, else total."""
    target = max(128, min(int(total), int(target)))
    best = None
    d = 128
    while d <= target:
        if total % d == 0:
            best = d
        d += 128
    return best if best is not None else total


def _pick_zq_rows(hz_eff, wz_eff, rh, w_full, hw, hzwz, target_lanes):
    """Pick THz (native zq rows per tile) dividing hz_eff so that both the f
    block (THz*rh*W lanes) and the zq block (THz*Wz lanes) satisfy the TPU
    (8,128) last-dim rule, preferring the largest f block <= target_lanes."""
    best = None       # valid and <= target, largest T
    fallback = None   # smallest valid T (THz == hz_eff is always valid)
    for thz in range(1, hz_eff + 1):
        if hz_eff % thz:
            continue
        t_f = thz * rh * w_full
        t_z = thz * wz_eff
        ok = (t_f % 128 == 0 or t_f == hw) and (t_z % 128 == 0 or t_z == hzwz)
        if not ok:
            continue
        if fallback is None or t_f < fallback[0]:
            fallback = (t_f, thz)
        if t_f <= target_lanes and (best is None or t_f > best[0]):
            best = (t_f, thz)
    return (best or fallback)[1]


# ---------------------------------------------------------------------------
# Wrapper
# ---------------------------------------------------------------------------
def spatial_norm_pallas(f_nchw, zq_nchw, gamma, beta, wy, by, wb, bb,
                        num_groups=32, eps=1e-6,
                        stats_block_lanes=None, apply_block_lanes=None):
    """f_nchw: (N, Cf, H, W), zq_nchw: (N, Cz, Hz, Wz) — PyTorch NCHW layout.
    wy, wb: (Cf, Cz) 1x1-conv weights (kernel dims squeezed); by, bb: (Cf,)."""
    N, Cf, H, W = f_nchw.shape
    _, Cz, Hz, Wz = zq_nchw.shape
    HW = H * W
    G = num_groups
    assert Cf % G == 0, "channels must be divisible by num_groups"
    gs = Cf // G

    vmem_limit = _vmem_limit_bytes()

    # NCHW stays contiguous -> these reshapes are free (no HBM transposes).
    f_l = f_nchw.reshape(N, Cf, HW)
    out_itemsize = jnp.dtype(f_nchw.dtype).itemsize
    f_itemsize = jnp.dtype(f_nchw.dtype).itemsize

    # ---- pass 1: per-(batch, channel) sums -------------------------------
    if stats_block_lanes is None:
        per_lane = 2 * Cf * f_itemsize + 4 * Cf              # dbl-buffered f + f32 temp
        stats_block_lanes = max(128, (vmem_limit // 2) // per_lane)
    Ts = _pick_lanes(HW, stats_block_lanes)
    n_tiles = HW // Ts
    # 2-way partial split so both v7x TensorCores get work even for small N.
    P = 2 if (n_tiles % 2 == 0 and n_tiles >= 4) else 1
    tpp = n_tiles // P

    stats1, stats2 = pl.pallas_call(
        _stats_kernel,
        out_shape=[jax.ShapeDtypeStruct((N, P, Cf, 1), jnp.float32),
                   jax.ShapeDtypeStruct((N, P, Cf, 1), jnp.float32)],
        grid=(N, P, tpp),
        in_specs=[pl.BlockSpec((1, Cf, Ts), lambda n, p, t: (n, 0, p * tpp + t))],
        out_specs=[pl.BlockSpec((1, 1, Cf, 1), lambda n, p, t: (n, p, 0, 0)),
                   pl.BlockSpec((1, 1, Cf, 1), lambda n, p, t: (n, p, 0, 0))],
        compiler_params=pltpu.CompilerParams(
            dimension_semantics=("parallel", "parallel", "arbitrary"),
            vmem_limit_bytes=vmem_limit),
    )(f_l)

    # ---- tiny per-batch finalize in plain JAX (O(N*Cf) work) -------------
    sum_f = stats1.sum(axis=1).reshape(N, Cf)
    sum_f2 = stats2.sum(axis=1).reshape(N, Cf)
    cnt = float(HW * gs)
    mean_g = sum_f.reshape(N, G, gs).sum(-1) / cnt                   # (N, G)
    sqmean_g = sum_f2.reshape(N, G, gs).sum(-1) / cnt
    var_g = jnp.maximum(sqmean_g - mean_g * mean_g, 0.0)             # clamp: no NaN
    inv_g = jax.lax.rsqrt(var_g + eps)
    mean_c = jnp.repeat(mean_g, gs, axis=1)                          # (N, Cf)
    inv_c = jnp.repeat(inv_g, gs, axis=1)
    gamma32 = gamma.reshape(1, Cf).astype(jnp.float32)
    beta32 = beta.reshape(1, Cf).astype(jnp.float32)
    scale = (inv_c * gamma32).reshape(N, Cf, 1)
    shift = (beta32 - mean_c * inv_c * gamma32).reshape(N, Cf, 1)

    # fused 1x1-conv weights / bias: (2Cf, Cz) / (2Cf, 1) — no transposes.
    w_fused = jnp.concatenate([wy, wb], axis=0).astype(zq_nchw.dtype)
    b_fused = jnp.concatenate([by, bb]).reshape(2 * Cf, 1).astype(jnp.float32)

    # ---- zq handling ------------------------------------------------------
    integer_ratio = (H % Hz == 0) and (W % Wz == 0)
    if integer_ratio:
        rh, rw = H // Hz, W // Wz
        zq_in = zq_nchw.reshape(N, Cz, Hz * Wz)              # native res, free reshape
        Hz_eff, Wz_eff = Hz, Wz
    else:
        # TODO(synk): non-integer nearest ratios fall back to materializing the
        # upsampled zq in HBM (extra Cz*H*W traffic); integer ratios (the
        # diffusers case) are expanded fully in-kernel above.
        hi = (jnp.arange(H) * Hz) // H
        wi = (jnp.arange(W) * Wz) // W
        zq_in = zq_nchw[:, :, hi[:, None], wi[None, :]].reshape(N, Cz, HW)
        rh, rw = 1, 1
        Hz_eff, Wz_eff = H, W

    # ---- pass 2: normalize + fused conv + nearest expand + combine --------
    if apply_block_lanes is None:
        per_lane = 2 * Cf * (f_itemsize + out_itemsize) + 12 * Cf   # blocks + f32 temps
        apply_block_lanes = max(128, (vmem_limit // 2) // per_lane)
    THz = _pick_zq_rows(Hz_eff, Wz_eff, rh, W, HW, Hz_eff * Wz_eff, apply_block_lanes)
    T = THz * rh * W
    Tz = THz * Wz_eff
    n2 = Hz_eff // THz

    inputs = [f_l, zq_in, scale, shift, w_fused, b_fused]
    in_specs = [
        pl.BlockSpec((1, Cf, T), lambda n, i: (n, 0, i)),        # f
        pl.BlockSpec((1, Cz, Tz), lambda n, i: (n, 0, i)),       # zq (native res)
        pl.BlockSpec((1, Cf, 1), lambda n, i: (n, 0, 0)),        # scale
        pl.BlockSpec((1, Cf, 1), lambda n, i: (n, 0, 0)),        # shift
        pl.BlockSpec((2 * Cf, Cz), lambda n, i: (0, 0)),         # fused W
        pl.BlockSpec((2 * Cf, 1), lambda n, i: (0, 0)),          # fused bias
    ]
    if rw > 1:
        wi_np = (np.arange(W) * Wz) // W
        ew = jnp.asarray((np.arange(Wz)[:, None] == wi_np[None, :]).astype(np.float32))
        inputs.append(ew)
        in_specs.append(pl.BlockSpec((Wz_eff, W), lambda n, i: (0, 0)))

    apply_kernel = functools.partial(_apply_kernel, cf=Cf, thz=THz, wz=Wz_eff,
                                     rh=rh, rw=rw)
    out_l = pl.pallas_call(
        apply_kernel,
        out_shape=jax.ShapeDtypeStruct((N, Cf, HW), f_nchw.dtype),
        grid=(N, n2),
        in_specs=in_specs,
        out_specs=pl.BlockSpec((1, Cf, T), lambda n, i: (n, 0, i)),
        compiler_params=pltpu.CompilerParams(
            dimension_semantics=("parallel", "parallel"),
            vmem_limit_bytes=vmem_limit),
    )(*inputs)

    # free reshape back to NCHW (no transpose).
    return out_l.reshape(N, Cf, H, W)


# ---------------------------------------------------------------------------
# Pure-JAX reference (mirrors the PyTorch module, NCHW)
# ---------------------------------------------------------------------------
def spatial_norm_reference(f, zq, gamma, beta, wy, by, wb, bb,
                           num_groups=32, eps=1e-6):
    N, Cf, H, W = f.shape
    _, Cz, Hz, Wz = zq.shape
    hi = (jnp.arange(H) * Hz) // H
    wi = (jnp.arange(W) * Wz) // W
    zq_up = zq[:, :, hi[:, None], wi[None, :]]                      # (N, Cz, H, W)

    gs = Cf // num_groups
    fg = f.reshape(N, num_groups, gs, H, W)
    mean = fg.mean(axis=(2, 3, 4), keepdims=True)
    var = fg.var(axis=(2, 3, 4), keepdims=True)
    norm = ((fg - mean) / jnp.sqrt(var + eps)).reshape(N, Cf, H, W)
    norm = norm * gamma.reshape(1, Cf, 1, 1) + beta.reshape(1, Cf, 1, 1)

    y = jnp.einsum('oc,nchw->nohw', wy, zq_up) + by.reshape(1, Cf, 1, 1)
    b = jnp.einsum('oc,nchw->nohw', wb, zq_up) + bb.reshape(1, Cf, 1, 1)
    return norm * y + b


if __name__ == "__main__":
    key = jax.random.PRNGKey(0)
    N, Cf, Cz = 2, 128, 64          # Cf divisible by 32 groups; lane-friendly
    H, W = 16, 16                   # f spatial
    Hz, Wz = 8, 8                   # zq spatial (2x nearest upsample in-kernel)

    k1, k2, k3, k4, k5, k6 = jax.random.split(key, 6)
    f = jax.random.normal(k1, (N, Cf, H, W), dtype=jnp.float32)
    zq = jax.random.normal(k2, (N, Cz, Hz, Wz), dtype=jnp.float32)

    gamma = jnp.ones((Cf,), jnp.float32) + 0.1 * jax.random.normal(k3, (Cf,))
    beta = 0.1 * jax.random.normal(k4, (Cf,))

    wy = 0.1 * jax.random.normal(k5, (Cf, Cz), dtype=jnp.float32)
    by = 0.05 * jax.random.normal(k5, (Cf,), dtype=jnp.float32)
    wb = 0.1 * jax.random.normal(k6, (Cf, Cz), dtype=jnp.float32)
    bb = 0.05 * jax.random.normal(k6, (Cf,), dtype=jnp.float32)

    # stats_block_lanes=128 -> 2 HW tiles/batch: exercises the accumulate path.
    out = spatial_norm_pallas(f, zq, gamma, beta, wy, by, wb, bb,
                              stats_block_lanes=128)
    out = jax.block_until_ready(out)

    ref = spatial_norm_reference(f, zq, gamma, beta, wy, by, wb, bb)
    np.testing.assert_allclose(np.asarray(out), np.asarray(ref),
                               rtol=1e-4, atol=2e-4)
    print("KERNEL_OK")
</pallas_src>

<mosaic_0001>
module attributes {stable_mosaic.version = 11 : i64} {
  func.func @_stats_kernel(%arg0: i32, %arg1: i32, %arg2: i32, %arg3: memref<1x128x128xf32, #tpu.memory_space<vmem>>, %arg4: memref<1x1x128x1xf32, #tpu.memory_space<vmem>>, %arg5: memref<1x1x128x1xf32, #tpu.memory_space<vmem>>) attributes {dimension_semantics = [#tpu.dimension_semantics<parallel>, #tpu.dimension_semantics<parallel>, #tpu.dimension_semantics<arbitrary>], iteration_bounds = array<i64: 2, 1, 2>, scalar_prefetch = 0 : i64, scratch_operands = 0 : i64, tpu.core_type = #tpu.core_type<tc>, window_params = [{transform_indices = @transform_0, window_bounds = array<i64: 1, 128, 128>}, {transform_indices = @transform_1, window_bounds = array<i64: 1, 1, 128, 1>}, {transform_indices = @transform_2, window_bounds = array<i64: 1, 1, 128, 1>}]} {
    %c0_i32 = arith.constant 0 : i32
    %0 = arith.cmpi eq, %arg2, %c0_i32 : i32
    %1 = arith.extui %0 : i1 to i32
    %c0_i32_0 = arith.constant 0 : i32
    %2 = arith.cmpi ne, %1, %c0_i32_0 : i32
    scf.if %2 {
      %cst_20 = arith.constant 0.000000e+00 : f32
      %22 = vector.broadcast %cst_20 : f32 to vector<1x1x128x1xf32>
      %c0_21 = arith.constant 0 : index
      %c0_22 = arith.constant 0 : index
      %c0_23 = arith.constant 0 : index
      %c0_24 = arith.constant 0 : index
      %23 = vector.load %arg4[%c0_21, %c0_22, %c0_23, %c0_24] : memref<1x1x128x1xf32, #tpu.memory_space<vmem>>, vector<1x1x128x1xf32>
      tpu.vector_store %arg4[%c0_21, %c0_22, %c0_23, %c0_24], %22 {strides = array<i32>} : memref<1x1x128x1xf32, #tpu.memory_space<vmem>>, vector<1x1x128x1xf32>,
      %cst_25 = arith.constant 0.000000e+00 : f32
      %24 = vector.broadcast %cst_25 : f32 to vector<1x1x128x1xf32>
      %c0_26 = arith.constant 0 : index
      %c0_27 = arith.constant 0 : index
      %c0_28 = arith.constant 0 : index
      %c0_29 = arith.constant 0 : index
      %25 = vector.load %arg5[%c0_26, %c0_27, %c0_28, %c0_29] : memref<1x1x128x1xf32, #tpu.memory_space<vmem>>, vector<1x1x128x1xf32>
      tpu.vector_store %arg5[%c0_26, %c0_27, %c0_28, %c0_29], %24 {strides = array<i32>} : memref<1x1x128x1xf32, #tpu.memory_space<vmem>>, vector<1x1x128x1xf32>,
    } else {
    }
    %c0 = arith.constant 0 : index
    %c0_1 = arith.constant 0 : index
    %c0_2 = arith.constant 0 : index
    %3 = vector.load %arg3[%c0, %c0_1, %c0_2] : memref<1x128x128xf32, #tpu.memory_space<vmem>>, vector<1x128x128xf32>
    %4 = vector.shape_cast %3 : vector<1x128x128xf32> to vector<128x128xf32>
    %c0_3 = arith.constant 0 : index
    %c0_4 = arith.constant 0 : index
    %c0_5 = arith.constant 0 : index
    %c0_6 = arith.constant 0 : index
    %5 = vector.load %arg4[%c0_3, %c0_4, %c0_5, %c0_6] : memref<1x1x128x1xf32, #tpu.memory_space<vmem>>, vector<1x1x128x1xf32>
    %6 = vector.shape_cast %5 : vector<1x1x128x1xf32> to vector<128x1xf32>
    %cst = arith.constant dense<0.000000e+00> : vector<128xf32>
    %7 = vector.multi_reduction <add>, %4, %cst [1] : vector<128x128xf32> to vector<128xf32>
    %8 = vector.shape_cast %7 : vector<128xf32> to vector<128x1xf32>
    %9 = arith.addf %6, %8 : vector<128x1xf32>
    %c0_7 = arith.constant 0 : index
    %c0_8 = arith.constant 0 : index
    %c0_9 = arith.constant 0 : index
    %c0_10 = arith.constant 0 : index
    %10 = vector.load %arg4[%c0_7, %c0_8, %c0_9, %c0_10] : memref<1x1x128x1xf32, #tpu.memory_space<vmem>>, vector<1x1x128x1xf32>
    %11 = vector.shape_cast %10 : vector<1x1x128x1xf32> to vector<128x1xf32>
    %12 = vector.shape_cast %9 : vector<128x1xf32> to vector<1x1x128x1xf32>
    tpu.vector_store %arg4[%c0_7, %c0_8, %c0_9, %c0_10], %12 {strides = array<i32>} : memref<1x1x128x1xf32, #tpu.memory_space<vmem>>, vector<1x1x128x1xf32>,
    %c0_11 = arith.constant 0 : index
    %c0_12 = arith.constant 0 : index
    %c0_13 = arith.constant 0 : index
    %c0_14 = arith.constant 0 : index
    %13 = vector.load %arg5[%c0_11, %c0_12, %c0_13, %c0_14] : memref<1x1x128x1xf32, #tpu.memory_space<vmem>>, vector<1x1x128x1xf32>
    %14 = vector.shape_cast %13 : vector<1x1x128x1xf32> to vector<128x1xf32>
    %15 = arith.mulf %4, %4 : vector<128x128xf32>
    %cst_15 = arith.constant dense<0.000000e+00> : vector<128xf32>
    %16 = vector.multi_reduction <add>, %15, %cst_15 [1] : vector<128x128xf32> to vector<128xf32>
    %17 = vector.shape_cast %16 : vector<128xf32> to vector<128x1xf32>
    %18 = arith.addf %14, %17 : vector<128x1xf32>
    %c0_16 = arith.constant 0 : index
    %c0_17 = arith.constant 0 : index
    %c0_18 = arith.constant 0 : index
    %c0_19 = arith.constant 0 : index
    %19 = vector.load %arg5[%c0_16, %c0_17, %c0_18, %c0_19] : memref<1x1x128x1xf32, #tpu.memory_space<vmem>>, vector<1x1x128x1xf32>
    %20 = vector.shape_cast %19 : vector<1x1x128x1xf32> to vector<128x1xf32>
    %21 = vector.shape_cast %18 : vector<128x1xf32> to vector<1x1x128x1xf32>
    tpu.vector_store %arg5[%c0_16, %c0_17, %c0_18, %c0_19], %21 {strides = array<i32>} : memref<1x1x128x1xf32, #tpu.memory_space<vmem>>, vector<1x1x128x1xf32>,
    return
  }
  func.func @transform_0(%arg0: i32, %arg1: i32, %arg2: i32) -> (i32, i32, i32) {
    %c2_i32 = arith.constant 2 : i32
    %0 = arith.muli %arg1, %c2_i32 : i32
    %1 = arith.addi %0, %arg2 : i32
    %c0_i32 = arith.constant 0 : i32
    %c0_i32_0 = arith.constant 0 : i32
    return %arg0, %c0_i32, %1 : i32, i32, i32
  }
  func.func @transform_1(%arg0: i32, %arg1: i32, %arg2: i32) -> (i32, i32, i32, i32) {
    %c0_i32 = arith.constant 0 : i32
    %c0_i32_0 = arith.constant 0 : i32
    %c0_i32_1 = arith.constant 0 : i32
    return %arg0, %arg1, %c0_i32, %c0_i32_0 : i32, i32, i32, i32
  }
  func.func @transform_2(%arg0: i32, %arg1: i32, %arg2: i32) -> (i32, i32, i32, i32) {
    %c0_i32 = arith.constant 0 : i32
    %c0_i32_0 = arith.constant 0 : i32
    %c0_i32_1 = arith.constant 0 : i32
    return %arg0, %arg1, %c0_i32, %c0_i32_0 : i32, i32, i32, i32
  }
}

</mosaic_0001>

<llo_original>
// kernel: tpu_custom_call.1
$region0: #{tpu_custom_call.1}
  #allocation0 [shape = 'u32[]', space=smem, size = 0x4, offset = 0x4, fixed_abs, tag = 'smem constant byte address 0x4 - core index']
  #allocation1 [shape = 'u32[72,128]{1,0:T(1,128)}', space=vmem, size = 0x9000, scoped, tag = 'internal scratch']
  %s0 = inlined_call_operand.hbm [shape: f32[2,128,256], index: 0, kind: input, shape index: {}]
  %s1 = inlined_call_operand.vmem [shape: f32[2,1,128,1], index: 1, kind: output, shape index: {0}]
  %s2 = inlined_call_operand.vmem [shape: f32[2,1,128,1], index: 2, kind: output, shape index: {1}]
  %3 = xla_tuple %s1, %s2
  %s4 = sld [smem:[#allocation0]]
  $region53: #{tpu_custom_call.1} parent=0
    _
  %s6 = ssub.s32 1, %s4
  %s7 = scalar_select 0, %s6, %s4
  $region1: #{tpu_custom_call.1} parent=0
    #allocation2 [shape = 'u8[131072]{0}', space=vmem, size = 0x20000, scoped, tag = 'input window, operand 0']
    #allocation3 [shape = 's32[2]{0}', space=sflag, size = 0x8, scoped, tag = 'scoped memory for tpu_custom_call.1']
    %8 = vsyncpa [#allocation3], 0
    %s9 = scalar_lea.sflag [#allocation3], 1
    %10 = vsyncpa %s9, 0
    loop: start=0, step=1, limit=6
    $region2: #{tpu_custom_call.1} parent=1 // loop_pre_header
      _
    $region3: #{tpu_custom_call.1} parent=1 // loop_header
      %s12 = sphi 0, %s16
      %p13 = scmp.ge.s32.totalorder %s12, 6
      %s19 = sphi 0, %s38
      %s20 = sphi 0, %s34
      %s21 = sphi 0, %s30
      %s22 = sphi 0, %s19
      %s23 = sphi 0, %s20
      %s24 = sphi 0, %s21
      %s25 = sphi 0, %s22
      %s26 = sphi 0, %s23
      %s27 = sphi 0, %s24
      %s47 = sphi 0, %s49
      %s50 = sphi 0, %s47
      %s51 = sphi 0, %s50
      %s67 = sphi 0, %s51
      %s75 = sphi 0, %s77
      %s78 = sphi 0, %s75
      %s79 = sphi 0, %s78
      %s95 = sphi 0, %s79
      %s103 = sphi 0, %s105
      %s106 = sphi 0, %s103
      %s107 = sphi 0, %s106
      %s123 = sphi 0, %s107
    $region4: #{tpu_custom_call.1} parent=1 // loop_header_branch
      %15 = sbr.rel (%p13) target = $region8
    $region5: #{tpu_custom_call.1} parent=1 // loop_body
      %s17 = ssub.s32 %s12, 1
      %s18 = ssub.s32 %s12, 2
      %s28 = sadd.s32 1, %s21
      %p29 = scmp.ge.s32.totalorder %s28, 2
      %s30 = scalar_select %p29, 0, %s28
      %s31 = sadd.s32 1, %s20
      %s32 = scalar_select %p29, %s31, %s20
      %p33 = scmp.ge.s32.totalorder %s32, 1
      %s34 = scalar_select %p33, 0, %s32
      %s35 = sadd.s32 1, %s19
      %s36 = scalar_select %p33, %s35, %s19
      %p37 = scmp.ge.s32.totalorder %s36, 2
      %s38 = scalar_select %p37, 0, %s36
      %s39 = smul.u32 %s20, 2
      %s40 = sadd.s32 %s39, %s21
      %s41 = smul.u32 %s34, 2
      %s42 = sadd.s32 %s41, %s30
      %s43 = ssub.s32 %s19, %s38
      %s44 = ssub.s32 %s40, %s42
      %s45 = sor.u32 %s43, %s44
      %p46 = scmp.eq.s32.totalorder %s45, 0
      %s48 = sadd.s32 %s47, 1
      %s49 = scalar_select %p46, %s47, %s48
      %p52 = pneg %p46
      %p53 = scmp.eq.s32.totalorder %s12, 3
      %p54 = por %p52, %p53
      %p55 = scmp.ne.s32.totalorder %s47, %s50
      %p56 = scmp.eq.s32.totalorder %s12, 0
      %p57 = por %p55, %p56
      %p58 = scmp.ne.s32.totalorder %s47, %s50
      %p59 = scmp.eq.s32.totalorder %s17, 3
      %p60 = por %p58, %p59
      %p61 = scmp.ne.s32.totalorder %s50, %s51
      %p62 = scmp.eq.s32.totalorder %s17, 0
      %p63 = por %p61, %p62
      %p64 = scmp.ne.s32.totalorder %s50, %s51
      %p65 = scmp.eq.s32.totalorder %s18, 3
      %p66 = por %p64, %p65
      %p68 = scmp.ne.s32.totalorder %s51, %s67
      %p69 = scmp.eq.s32.totalorder %s18, 0
      %p70 = por %p68, %p69
      %s71 = ssub.s32 %s19, %s38
      %s72 = ssub.s32 %s20, %s34
      %s73 = sor.u32 %s71, %s72
      %p74 = scmp.eq.s32.totalorder %s73, 0
      %s76 = sadd.s32 %s75, 1
      %s77 = scalar_select %p74, %s75, %s76
      %p80 = pneg %p74
      %p81 = scmp.eq.s32.totalorder %s12, 3
      %p82 = por %p80, %p81
      %p83 = scmp.ne.s32.totalorder %s75, %s78
      %p84 = scmp.eq.s32.totalorder %s12, 0
      %p85 = por %p83, %p84
      %p86 = scmp.ne.s32.totalorder %s75, %s78
      %p87 = scmp.eq.s32.totalorder %s17, 3
      %p88 = por %p86, %p87
      %p89 = scmp.ne.s32.totalorder %s78, %s79
      %p90 = scmp.eq.s32.totalorder %s17, 0
      %p91 = por %p89, %p90
      %p92 = scmp.ne.s32.totalorder %s78, %s79
      %p93 = scmp.eq.s32.totalorder %s18, 3
      %p94 = por %p92, %p93
      %p96 = scmp.ne.s32.totalorder %s79, %s95
      %p97 = scmp.eq.s32.totalorder %s18, 0
      %p98 = por %p96, %p97
      %s99 = ssub.s32 %s19, %s38
      %s100 = ssub.s32 %s20, %s34
      %s101 = sor.u32 %s99, %s100
      %p102 = scmp.eq.s32.totalorder %s101, 0
      %s104 = sadd.s32 %s103, 1
      %s105 = scalar_select %p102, %s103, %s104
      %p108 = pneg %p102
      %p109 = scmp.eq.s32.totalorder %s12, 3
      %p110 = por %p108, %p109
      %p111 = scmp.ne.s32.totalorder %s103, %s106
      %p112 = scmp.eq.s32.totalorder %s12, 0
      %p113 = por %p111, %p112
      %p114 = scmp.ne.s32.totalorder %s103, %s106
      %p115 = scmp.eq.s32.totalorder %s17, 3
      %p116 = por %p114, %p115
      %p117 = scmp.ne.s32.totalorder %s106, %s107
      %p118 = scmp.eq.s32.totalorder %s17, 0
      %p119 = por %p117, %p118
      %p120 = scmp.ne.s32.totalorder %s106, %s107
      %p121 = scmp.eq.s32.totalorder %s18, 3
      %p122 = por %p120, %p121
      %p124 = scmp.ne.s32.totalorder %s107, %s123
      %p125 = scmp.eq.s32.totalorder %s18, 0
      %p126 = por %p124, %p125
      %p127 = scmp.le.s32.totalorder 1, %s12
      %p128 = scmp.lt.s32.totalorder %s12, 5
      %p129 = pnand %p127, %p128
      %p130 = pneg %p129
      // Predicated region
      $region9: #{tpu_custom_call.1} parent=5 // pred_check
        _
      $region10: #{tpu_custom_call.1} parent=5 // pred_check_branch
        %132 = sbr.rel (%p129) target = $region12
      $region11: #{tpu_custom_call.1} parent=5 // pred_region
        %s133 = ssub.s32 %s12, 1
      $region12: #{tpu_custom_call.1} parent=5 // pred_fallthru
        _
      %p134 = scmp.lt.s32.totalorder %s12, 4
      // Predicated region
      $region13: #{tpu_custom_call.1} parent=5 // pred_check
        %p135 = pneg %p134
      $region14: #{tpu_custom_call.1} parent=5 // pred_check_branch
        %137 = sbr.rel (%p135) target = $region16
      $region15: #{tpu_custom_call.1} parent=5 // pred_region
        // Predicated region
        $region17: #{tpu_custom_call.1} parent=15 // pred_check
          %p138 = pneg %p57
        $region18: #{tpu_custom_call.1} parent=15 // pred_check_branch
          %140 = sbr.rel (%p138) target = $region20
        $region19: #{tpu_custom_call.1} parent=15 // pred_region
          %s141 = sand.u32 %s47, 1
          %s142 = scalar_lea.sflag [#allocation3], %s141
          %s143 = sand.u32 %s47, 1
          %s144 = smul.addr %s143, 128
          %s145 = scalar_lea.vmem [#allocation2], %s144
          %s146 = smul.u32 %s20, 2
          %s147 = sadd.s32 %s146, %s21
          %149 = vsyncadd %s142, 0
          %s150 = smul.addr %s19, 32
          %s151 = sadd.s32 %s147, %s150
          %s152 = smul.addr %s151, 8
          %s153 = scalar_lea.hbm %s0, %s152
          %s154 = sshll.u32 %s153, 4
          %s155 = int_to_ptr.hbm [resolvable:$true] %s154
          %s156 = sshll.u32 %s145, 4
          %s157 = int_to_ptr.vmem [resolvable:$true] %s156
          %162 = dma.hbm_to_vmem [thread:$0]  %s155, 2048, %s157, %s142, 256, 128, 8
        $region20: #{tpu_custom_call.1} parent=15 // pred_fallthru
          _
      $region16: #{tpu_custom_call.1} parent=5 // pred_fallthru
        _
      %p163 = scmp.le.s32.totalorder 1, %s12
      %p164 = scmp.lt.s32.totalorder %s12, 5
      %p165 = pnand %p163, %p164
      %p166 = pneg %p165
      // Predicated region
      $region21: #{tpu_custom_call.1} parent=5 // pred_check
        _
      $region22: #{tpu_custom_call.1} parent=5 // pred_check_branch
        %168 = sbr.rel (%p165) target = $region24
      $region23: #{tpu_custom_call.1} parent=5 // pred_region
        %s169 = ssub.s32 %s12, 1
        %s170 = sand.u32 %s50, 1
        %s171 = scalar_lea.sflag [#allocation3], %s170
        %s172 = sand.u32 %s50, 1
        %s173 = smul.addr %s172, 128
        %s174 = scalar_lea.vmem [#allocation2], %s173
        // Predicated region
        $region25: #{tpu_custom_call.1} parent=23 // pred_check
          %p175 = pneg %p63
        $region26: #{tpu_custom_call.1} parent=23 // pred_check_branch
          %177 = sbr.rel (%p175) target = $region28
        $region27: #{tpu_custom_call.1} parent=23 // pred_region
          %179 = dma.done %s171, 2048
        $region28: #{tpu_custom_call.1} parent=23 // pred_fallthru
          _
        %s180 = sand.u32 %s50, 1
        %s181 = scalar_lea.sflag [#allocation3], %s180
        %s182 = sand.u32 %s50, 1
        %s183 = smul.addr %s182, 128
        %s184 = scalar_lea.vmem [#allocation2], %s183
        %p185 = pneg %p63
        %p186 = pneg %p60
        %p187 = pneg %p91
        %p188 = pneg %p88
        %p189 = scmp.lt.s32.totalorder %s22, 1
        %s190 = scalar_select %p189, %s22, 1
        %p191 = scmp.lt.s32.totalorder %s23, 0
        %s192 = scalar_select %p191, %s23, 0
        %s193 = smul.addr %s192, 16
        %s194 = smul.addr %s190, 16
        %s195 = sadd.s32 %s193, %s194
        %s196 = smul.addr %s195, 8
        %s197 = scalar_lea.vmem %s1, %s196
        %p198 = pneg %p119
        %p199 = pneg %p116
        %p200 = scmp.lt.s32.totalorder %s22, 1
        %s201 = scalar_select %p200, %s22, 1
        %p202 = scmp.lt.s32.totalorder %s23, 0
        %s203 = scalar_select %p202, %s23, 0
        %s204 = smul.addr %s203, 16
        %s205 = smul.addr %s201, 16
        %s206 = sadd.s32 %s204, %s205
        %s207 = smul.addr %s206, 8
        %s208 = scalar_lea.vmem %s2, %s207
        %s209 = smul.u32 %s23, 2
        %s210 = sadd.s32 %s209, %s24
        %p211 = scmp.lt.s32.totalorder %s22, 1
        %s212 = scalar_select %p211, %s22, 1
        %p213 = scmp.lt.s32.totalorder %s23, 0
        %s214 = scalar_select %p213, %s23, 0
        %s215 = smul.addr %s214, 16
        %s216 = smul.addr %s212, 16
        %s217 = sadd.s32 %s215, %s216
        %s218 = smul.addr %s217, 8
        %s219 = scalar_lea.vmem %s1, %s218
        %p220 = scmp.lt.s32.totalorder %s22, 1
        %s221 = scalar_select %p220, %s22, 1
        %p222 = scmp.lt.s32.totalorder %s23, 0
        %s223 = scalar_select %p222, %s23, 0
        %s224 = smul.addr %s223, 16
        %s225 = smul.addr %s221, 16
        %s226 = sadd.s32 %s224, %s225
        %s227 = smul.addr %s226, 8
        %s228 = scalar_lea.vmem %s2, %s227
        %p229 = scmp.eq.s32.totalorder %s24, 0
        // Predicated region
        $region29: #{tpu_custom_call.1} parent=23 // pred_check
          %p230 = pneg %p229
        $region30: #{tpu_custom_call.1} parent=23 // pred_check_branch
          %232 = sbr.rel (%p230) target = $region32
        $region31: #{tpu_custom_call.1} parent=23 // pred_region
          %vm233 = vcmask 7168
          %234 = vst.msk [vmem:[%s219] sm:$0xff] %vm233, 0.0
          %235 = vst.msk [vmem:[%s219 + $0x8] sm:$0xff] %vm233, 0.0
          %236 = vst.msk [vmem:[%s219 + $0x10] sm:$0xff] %vm233, 0.0
          %237 = vst.msk [vmem:[%s219 + $0x18] sm:$0xff] %vm233, 0.0
          %238 = vst.msk [vmem:[%s219 + $0x20] sm:$0xff] %vm233, 0.0
          %239 = vst.msk [vmem:[%s219 + $0x28] sm:$0xff] %vm233, 0.0
          %240 = vst.msk [vmem:[%s219 + $0x30] sm:$0xff] %vm233, 0.0
          %241 = vst.msk [vmem:[%s219 + $0x38] sm:$0xff] %vm233, 0.0
          %242 = vst.msk [vmem:[%s219 + $0x40] sm:$0xff] %vm233, 0.0
          %243 = vst.msk [vmem:[%s219 + $0x48] sm:$0xff] %vm233, 0.0
          %244 = vst.msk [vmem:[%s219 + $0x50] sm:$0xff] %vm233, 0.0
          %245 = vst.msk [vmem:[%s219 + $0x58] sm:$0xff] %vm233, 0.0
          %246 = vst.msk [vmem:[%s219 + $0x60] sm:$0xff] %vm233, 0.0
          %247 = vst.msk [vmem:[%s219 + $0x68] sm:$0xff] %vm233, 0.0
          %248 = vst.msk [vmem:[%s219 + $0x70] sm:$0xff] %vm233, 0.0
          %249 = vst.msk [vmem:[%s219 + $0x78] sm:$0xff] %vm233, 0.0
          %250 = vst.msk [vmem:[%s228] sm:$0xff] %vm233, 0.0
          %251 = vst.msk [vmem:[%s228 + $0x8] sm:$0xff] %vm233, 0.0
          %252 = vst.msk [vmem:[%s228 + $0x10] sm:$0xff] %vm233, 0.0
          %253 = vst.msk [vmem:[%s228 + $0x18] sm:$0xff] %vm233, 0.0
          %254 = vst.msk [vmem:[%s228 + $0x20] sm:$0xff] %vm233, 0.0
          %255 = vst.msk [vmem:[%s228 + $0x28] sm:$0xff] %vm233, 0.0
          %256 = vst.msk [vmem:[%s228 + $0x30] sm:$0xff] %vm233, 0.0
          %257 = vst.msk [vmem:[%s228 + $0x38] sm:$0xff] %vm233, 0.0
          %258 = vst.msk [vmem:[%s228 + $0x40] sm:$0xff] %vm233, 0.0
          %259 = vst.msk [vmem:[%s228 + $0x48] sm:$0xff] %vm233, 0.0
          %260 = vst.msk [vmem:[%s228 + $0x50] sm:$0xff] %vm233, 0.0
          %261 = vst.msk [vmem:[%s228 + $0x58] sm:$0xff] %vm233, 0.0
          %262 = vst.msk [vmem:[%s228 + $0x60] sm:$0xff] %vm233, 0.0
          %263 = vst.msk [vmem:[%s228 + $0x68] sm:$0xff] %vm233, 0.0
          %264 = vst.msk [vmem:[%s228 + $0x70] sm:$0xff] %vm233, 0.0
          %265 = vst.msk [vmem:[%s228 + $0x78] sm:$0xff] %vm233, 0.0
        $region32: #{tpu_custom_call.1} parent=23 // pred_fallthru
          _
        %v266 = vld [vmem:[%s174] sm:$0xff]
        %v267 = vld [vmem:[%s174 + $0x8] sm:$0xff]
        %v268 = vld [vmem:[%s174 + $0x10] sm:$0xff]
        %v269 = vld [vmem:[%s174 + $0x18] sm:$0xff]
        %v270 = vld [vmem:[%s174 + $0x20] sm:$0xff]
        %v271 = vld [vmem:[%s174 + $0x28] sm:$0xff]
        %v272 = vld [vmem:[%s174 + $0x30] sm:$0xff]
        %v273 = vld [vmem:[%s174 + $0x38] sm:$0xff]
        %v274 = vld [vmem:[%s174 + $0x40] sm:$0xff]
        %v275 = vld [vmem:[%s174 + $0x48] sm:$0xff]
        %v276 = vld [vmem:[%s174 + $0x50] sm:$0xff]
        %v277 = vld [vmem:[%s174 + $0x58] sm:$0xff]
        %v278 = vld [vmem:[%s174 + $0x60] sm:$0xff]
        %v279 = vld [vmem:[%s174 + $0x68] sm:$0xff]
        %v280 = vld [vmem:[%s174 + $0x70] sm:$0xff]
        %v281 = vld [vmem:[%s174 + $0x78] sm:$0xff]
        %v282 = vld [vmem:[%s219] sm:$0xff]
        %v283 = vld [vmem:[%s219 + $0x8] sm:$0xff]
        %v284 = vld [vmem:[%s219 + $0x10] sm:$0xff]
        %v285 = vld [vmem:[%s219 + $0x18] sm:$0xff]
        %v286 = vld [vmem:[%s219 + $0x20] sm:$0xff]
        %v287 = vld [vmem:[%s219 + $0x28] sm:$0xff]
        %v288 = vld [vmem:[%s219 + $0x30] sm:$0xff]
        %v289 = vld [vmem:[%s219 + $0x38] sm:$0xff]
        %v290 = vld [vmem:[%s219 + $0x40] sm:$0xff]
        %v291 = vld [vmem:[%s219 + $0x48] sm:$0xff]
        %v292 = vld [vmem:[%s219 + $0x50] sm:$0xff]
        %v293 = vld [vmem:[%s219 + $0x58] sm:$0xff]
        %v294 = vld [vmem:[%s219 + $0x60] sm:$0xff]
        %v295 = vld [vmem:[%s219 + $0x68] sm:$0xff]
        %v296 = vld [vmem:[%s219 + $0x70] sm:$0xff]
        %v297 = vld [vmem:[%s219 + $0x78] sm:$0xff]
        %298 = vadd.xlane.f32.xlu0 %v266
        %v299 = vpop.xlane.xlu0 %298
        %300 = vadd.xlane.f32.xlu0 %v267
        %v301 = vpop.xlane.xlu0 %300
        %302 = vadd.xlane.f32.xlu0 %v268
        %v303 = vpop.xlane.xlu0 %302
        %304 = vadd.xlane.f32.xlu0 %v269
        %v305 = vpop.xlane.xlu0 %304
        %306 = vadd.xlane.f32.xlu0 %v270
        %v307 = vpop.xlane.xlu0 %306
        %308 = vadd.xlane.f32.xlu0 %v271
        %v309 = vpop.xlane.xlu0 %308
        %310 = vadd.xlane.f32.xlu0 %v272
        %v311 = vpop.xlane.xlu0 %310
        %312 = vadd.xlane.f32.xlu0 %v273
        %v313 = vpop.xlane.xlu0 %312
        %314 = vadd.xlane.f32.xlu0 %v274
        %v315 = vpop.xlane.xlu0 %314
        %316 = vadd.xlane.f32.xlu0 %v275
        %v317 = vpop.xlane.xlu0 %316
        %318 = vadd.xlane.f32.xlu0 %v276
        %v319 = vpop.xlane.xlu0 %318
        %320 = vadd.xlane.f32.xlu0 %v277
        %v321 = vpop.xlane.xlu0 %320
        %322 = vadd.xlane.f32.xlu0 %v278
        %v323 = vpop.xlane.xlu0 %322
        %324 = vadd.xlane.f32.xlu0 %v279
        %v325 = vpop.xlane.xlu0 %324
        %326 = vadd.xlane.f32.xlu0 %v280
        %v327 = vpop.xlane.xlu0 %326
        %328 = vadd.xlane.f32.xlu0 %v281
        %v329 = vpop.xlane.xlu0 %328
        %v330 = vadd.f32 %v282, %v299
        %v331 = vadd.f32 %v283, %v301
        %v332 = vadd.f32 %v284, %v303
        %v333 = vadd.f32 %v285, %v305
        %v334 = vadd.f32 %v286, %v307
        %v335 = vadd.f32 %v287, %v309
        %v336 = vadd.f32 %v288, %v311
        %v337 = vadd.f32 %v289, %v313
        %v338 = vadd.f32 %v290, %v315
        %v339 = vadd.f32 %v291, %v317
        %v340 = vadd.f32 %v292, %v319
        %v341 = vadd.f32 %v293, %v321
        %v342 = vadd.f32 %v294, %v323
        %v343 = vadd.f32 %v295, %v325
        %v344 = vadd.f32 %v296, %v327
        %v345 = vadd.f32 %v297, %v329
        %vm346 = vcmask 7168
        %347 = vst.msk [vmem:[%s219] sm:$0xff] %vm346, %v330
        %348 = vst.msk [vmem:[%s219 + $0x8] sm:$0xff] %vm346, %v331
        %349 = vst.msk [vmem:[%s219 + $0x10] sm:$0xff] %vm346, %v332
        %350 = vst.msk [vmem:[%s219 + $0x18] sm:$0xff] %vm346, %v333
        %351 = vst.msk [vmem:[%s219 + $0x20] sm:$0xff] %vm346, %v334
        %352 = vst.msk [vmem:[%s219 + $0x28] sm:$0xff] %vm346, %v335
        %353 = vst.msk [vmem:[%s219 + $0x30] sm:$0xff] %vm346, %v336
        %354 = vst.msk [vmem:[%s219 + $0x38] sm:$0xff] %vm346, %v337
        %355 = vst.msk [vmem:[%s219 + $0x40] sm:$0xff] %vm346, %v338
        %356 = vst.msk [vmem:[%s219 + $0x48] sm:$0xff] %vm346, %v339
        %357 = vst.msk [vmem:[%s219 + $0x50] sm:$0xff] %vm346, %v340
        %358 = vst.msk [vmem:[%s219 + $0x58] sm:$0xff] %vm346, %v341
        %359 = vst.msk [vmem:[%s219 + $0x60] sm:$0xff] %vm346, %v342
        %360 = vst.msk [vmem:[%s219 + $0x68] sm:$0xff] %vm346, %v343
        %361 = vst.msk [vmem:[%s219 + $0x70] sm:$0xff] %vm346, %v344
        %362 = vst.msk [vmem:[%s219 + $0x78] sm:$0xff] %vm346, %v345
        %v363 = vld [vmem:[%s228] sm:$0xff]
        %v364 = vld [vmem:[%s228 + $0x8] sm:$0xff]
        %v365 = vld [vmem:[%s228 + $0x10] sm:$0xff]
        %v366 = vld [vmem:[%s228 + $0x18] sm:$0xff]
        %v367 = vld [vmem:[%s228 + $0x20] sm:$0xff]
        %v368 = vld [vmem:[%s228 + $0x28] sm:$0xff]
        %v369 = vld [vmem:[%s228 + $0x30] sm:$0xff]
        %v370 = vld [vmem:[%s228 + $0x38] sm:$0xff]
        %v371 = vld [vmem:[%s228 + $0x40] sm:$0xff]
        %v372 = vld [vmem:[%s228 + $0x48] sm:$0xff]
        %v373 = vld [vmem:[%s228 + $0x50] sm:$0xff]
        %v374 = vld [vmem:[%s228 + $0x58] sm:$0xff]
        %v375 = vld [vmem:[%s228 + $0x60] sm:$0xff]
        %v376 = vld [vmem:[%s228 + $0x68] sm:$0xff]
        %v377 = vld [vmem:[%s228 + $0x70] sm:$0xff]
        %v378 = vld [vmem:[%s228 + $0x78] sm:$0xff]
        %v379 = vmul.f32 %v266, %v266
        %v380 = vmul.f32 %v267, %v267
        %v381 = vmul.f32 %v268, %v268
        %v382 = vmul.f32 %v269, %v269
        %v383 = vmul.f32 %v270, %v270
        %v384 = vmul.f32 %v271, %v271
        %v385 = vmul.f32 %v272, %v272
        %v386 = vmul.f32 %v273, %v273
        %v387 = vmul.f32 %v274, %v274
        %v388 = vmul.f32 %v275, %v275
        %v389 = vmul.f32 %v276, %v276
        %v390 = vmul.f32 %v277, %v277
        %v391 = vmul.f32 %v278, %v278
        %v392 = vmul.f32 %v279, %v279
        %v393 = vmul.f32 %v280, %v280
        %v394 = vmul.f32 %v281, %v281
        %395 = vadd.xlane.f32.xlu0 %v379
        %v396 = vpop.xlane.xlu0 %395
        %397 = vadd.xlane.f32.xlu0 %v380
        %v398 = vpop.xlane.xlu0 %397
        %399 = vadd.xlane.f32.xlu0 %v381
        %v400 = vpop.xlane.xlu0 %399
        %401 = vadd.xlane.f32.xlu0 %v382
        %v402 = vpop.xlane.xlu0 %401
        %403 = vadd.xlane.f32.xlu0 %v383
        %v404 = vpop.xlane.xlu0 %403
        %405 = vadd.xlane.f32.xlu0 %v384
        %v406 = vpop.xlane.xlu0 %405
        %407 = vadd.xlane.f32.xlu0 %v385
        %v408 = vpop.xlane.xlu0 %407
        %409 = vadd.xlane.f32.xlu0 %v386
        %v410 = vpop.xlane.xlu0 %409
        %411 = vadd.xlane.f32.xlu0 %v387
        %v412 = vpop.xlane.xlu0 %411
        %413 = vadd.xlane.f32.xlu0 %v388
        %v414 = vpop.xlane.xlu0 %413
        %415 = vadd.xlane.f32.xlu0 %v389
        %v416 = vpop.xlane.xlu0 %415
        %417 = vadd.xlane.f32.xlu0 %v390
        %v418 = vpop.xlane.xlu0 %417
        %419 = vadd.xlane.f32.xlu0 %v391
        %v420 = vpop.xlane.xlu0 %419
        %421 = vadd.xlane.f32.xlu0 %v392
        %v422 = vpop.xlane.xlu0 %421
        %423 = vadd.xlane.f32.xlu0 %v393
        %v424 = vpop.xlane.xlu0 %423
        %425 = vadd.xlane.f32.xlu0 %v394
        %v426 = vpop.xlane.xlu0 %425
        %v427 = vadd.f32 %v363, %v396
        %v428 = vadd.f32 %v364, %v398
        %v429 = vadd.f32 %v365, %v400
        %v430 = vadd.f32 %v366, %v402
        %v431 = vadd.f32 %v367, %v404
        %v432 = vadd.f32 %v368, %v406
        %v433 = vadd.f32 %v369, %v408
        %v434 = vadd.f32 %v370, %v410
        %v435 = vadd.f32 %v371, %v412
        %v436 = vadd.f32 %v372, %v414
        %v437 = vadd.f32 %v373, %v416
        %v438 = vadd.f32 %v374, %v418
        %v439 = vadd.f32 %v375, %v420
        %v440 = vadd.f32 %v376, %v422
        %v441 = vadd.f32 %v377, %v424
        %v442 = vadd.f32 %v378, %v426
        %443 = vst.msk [vmem:[%s228] sm:$0xff] %vm346, %v427
        %444 = vst.msk [vmem:[%s228 + $0x8] sm:$0xff] %vm346, %v428
        %445 = vst.msk [vmem:[%s228 + $0x10] sm:$0xff] %vm346, %v429
        %446 = vst.msk [vmem:[%s228 + $0x18] sm:$0xff] %vm346, %v430
        %447 = vst.msk [vmem:[%s228 + $0x20] sm:$0xff] %vm346, %v431
        %448 = vst.msk [vmem:[%s228 + $0x28] sm:$0xff] %vm346, %v432
        %449 = vst.msk [vmem:[%s228 + $0x30] sm:$0xff] %vm346, %v433
        %450 = vst.msk [vmem:[%s228 + $0x38] sm:$0xff] %vm346, %v434
        %451 = vst.msk [vmem:[%s228 + $0x40] sm:$0xff] %vm346, %v435
        %452 = vst.msk [vmem:[%s228 + $0x48] sm:$0xff] %vm346, %v436
        %453 = vst.msk [vmem:[%s228 + $0x50] sm:$0xff] %vm346, %v437
        %454 = vst.msk [vmem:[%s228 + $0x58] sm:$0xff] %vm346, %v438
        %455 = vst.msk [vmem:[%s228 + $0x60] sm:$0xff] %vm346, %v439
        %456 = vst.msk [vmem:[%s228 + $0x68] sm:$0xff] %vm346, %v440
        %457 = vst.msk [vmem:[%s228 + $0x70] sm:$0xff] %vm346, %v441
        %458 = vst.msk [vmem:[%s228 + $0x78] sm:$0xff] %vm346, %v442
        %p459 = scmp.lt.s32.totalorder %s22, 1
        %s460 = scalar_select %p459, %s22, 1
        %p461 = scmp.lt.s32.totalorder %s23, 0
        %s462 = scalar_select %p461, %s23, 0
        %s463 = smul.addr %s462, 16
        %s464 = smul.addr %s460, 16
        %s465 = sadd.s32 %s463, %s464
        %s466 = smul.addr %s465, 8
        %s467 = scalar_lea.vmem %s1, %s466
        %p468 = scmp.lt.s32.totalorder %s22, 1
        %s469 = scalar_select %p468, %s22, 1
        %p470 = scmp.lt.s32.totalorder %s23, 0
        %s471 = scalar_select %p470, %s23, 0
        %s472 = smul.addr %s471, 16
        %s473 = smul.addr %s469, 16
        %s474 = sadd.s32 %s472, %s473
        %s475 = smul.addr %s474, 8
        %s476 = scalar_lea.vmem %s2, %s475
        // Predicated region
        $region33: #{tpu_custom_call.1} parent=23 // pred_check
          %p477 = pneg %p88
        $region34: #{tpu_custom_call.1} parent=23 // pred_check_branch
          %479 = sbr.rel (%p477) target = $region36
        $region35: #{tpu_custom_call.1} parent=23 // pred_region
          _
        $region36: #{tpu_custom_call.1} parent=23 // pred_fallthru
          _
        // Predicated region
        $region37: #{tpu_custom_call.1} parent=23 // pred_check
          %p480 = pneg %p116
        $region38: #{tpu_custom_call.1} parent=23 // pred_check_branch
          %482 = sbr.rel (%p480) target = $region40
        $region39: #{tpu_custom_call.1} parent=23 // pred_region
          _
        $region40: #{tpu_custom_call.1} parent=23 // pred_fallthru
          _
      $region24: #{tpu_custom_call.1} parent=5 // pred_fallthru
        _
      %p483 = scmp.le.s32.totalorder 2, %s12
      // Predicated region
      $region41: #{tpu_custom_call.1} parent=5 // pred_check
        %p484 = pneg %p483
      $region42: #{tpu_custom_call.1} parent=5 // pred_check_branch
        %486 = sbr.rel (%p484) target = $region44
      $region43: #{tpu_custom_call.1} parent=5 // pred_region
        %s487 = ssub.s32 %s12, 2
        // Predicated region
        $region45: #{tpu_custom_call.1} parent=43 // pred_check
          %p488 = pneg %p94
        $region46: #{tpu_custom_call.1} parent=43 // pred_check_branch
          %490 = sbr.rel (%p488) target = $region48
        $region47: #{tpu_custom_call.1} parent=43 // pred_region
          %p491 = scmp.lt.s32.totalorder %s25, 1
          %s492 = scalar_select %p491, %s25, 1
          %p493 = scmp.lt.s32.totalorder %s26, 0
          %s494 = scalar_select %p493, %s26, 0
          %s495 = smul.addr %s494, 16
          %s496 = smul.addr %s492, 16
          %s497 = sadd.s32 %s495, %s496
          %s498 = smul.addr %s497, 8
          %s499 = scalar_lea.vmem %s1, %s498
        $region48: #{tpu_custom_call.1} parent=43 // pred_fallthru
          _
        // Predicated region
        $region49: #{tpu_custom_call.1} parent=43 // pred_check
          %p500 = pneg %p122
        $region50: #{tpu_custom_call.1} parent=43 // pred_check_branch
          %502 = sbr.rel (%p500) target = $region52
        $region51: #{tpu_custom_call.1} parent=43 // pred_region
          %p503 = scmp.lt.s32.totalorder %s25, 1
          %s504 = scalar_select %p503, %s25, 1
          %p505 = scmp.lt.s32.totalorder %s26, 0
          %s506 = scalar_select %p505, %s26, 0
          %s507 = smul.addr %s506, 16
          %s508 = smul.addr %s504, 16
          %s509 = sadd.s32 %s507, %s508
          %s510 = smul.addr %s509, 8
          %s511 = scalar_lea.vmem %s2, %s510
        $region52: #{tpu_custom_call.1} parent=43 // pred_fallthru
          _
      $region44: #{tpu_custom_call.1} parent=5 // pred_fallthru
        _
    $region6: #{tpu_custom_call.1} parent=1 // loop_footer
      %s16 = sadd.s32 1, %s12
    $region7: #{tpu_custom_call.1} parent=1 // loop_footer_branch
      %11 = sbr.rel target = $region3
    $region8: #{tpu_custom_call.1} parent=1 // loop_exit
      _
    %512 = vsyncpa [#allocation3], 1
    %s513 = scalar_lea.sflag [#allocation3], 1
    %514 = vsyncpa %s513, 1

</llo_original>
